<compile_context>
chip_gen: v5e
topology: v5e:2x2
jax: 0.10.0
libtpu: 0.0.40
codegen_flags: <defaults>
</compile_context>

<pallas_src>
import functools

import jax
import jax.numpy as jnp
import numpy as np
from jax.experimental import pallas as pl
from jax.experimental.pallas import tpu as pltpu


# --------------------------------------------------------------------------- #
# Kernel: one (row_tile, N) slab of theta in, one (row_tile, N-1) slab out.
# --------------------------------------------------------------------------- #
def _smoothness_kernel(theta_ref, out_ref, *, combined_scale):
    th = theta_ref[...].astype(jnp.float32)          # (tT, N)
    # diff(n=1, axis=1): lane-shifted subtract on the loaded tile.
    d = th[:, 1:] - th[:, :-1]                       # (tT, N-1)
    # (d * w)^2 * s  ==  d^2 * (w^2 * s)  -- constant folded at trace time.
    out_ref[...] = (d * d * combined_scale).astype(out_ref.dtype)


def _pick_row_tile(T, N, vmem_budget_bytes=8 * 1024 * 1024):
    """Largest multiple-of-8 divisor of T whose (double-buffered) block fits a
    conservative VMEM budget; otherwise the full T (always a legal block)."""
    # bytes per row for one f32-widened input block + output block, x2 buffers
    bytes_per_row = 4 * (N + (N - 1)) * 2
    max_rows = max(8, vmem_budget_bytes // max(bytes_per_row, 1))
    for cand in (1024, 512, 256, 128, 64, 32, 16, 8):
        if cand <= max_rows and cand <= T and T % cand == 0:
            return cand
    return T  # full-extent block on the sublane dim is always legal


# --------------------------------------------------------------------------- #
# Wrapper
# --------------------------------------------------------------------------- #
def smoothness_loss(theta, body_axis_weight, smoothness_weight=1.0):
    T, N = theta.shape
    assert N >= 2, "theta must have at least 2 body-axis points"

    row_tile = _pick_row_tile(T, N)
    grid = (T // row_tile,)

    kernel = functools.partial(
        _smoothness_kernel,
        combined_scale=float(body_axis_weight) ** 2 * float(smoothness_weight),
    )

    return pl.pallas_call(
        kernel,
        out_shape=jax.ShapeDtypeStruct((T, N - 1), theta.dtype),
        grid=grid,
        in_specs=[
            # Full N on the lane axis (block last dim == full array dim).
            pl.BlockSpec((row_tile, N), lambda i: (i, 0)),
        ],
        out_specs=pl.BlockSpec((row_tile, N - 1), lambda i: (i, 0)),
        compiler_params=pltpu.CompilerParams(
            # Independent row tiles: let both TCs on v7x take alternate tiles.
            dimension_semantics=("parallel",),
        ),
    )(theta)


# --------------------------------------------------------------------------- #
# Pure-numpy reference (mirrors the torch module line by line)
# --------------------------------------------------------------------------- #
def _reference(theta, body_axis_weight, smoothness_weight=1.0):
    theta = np.asarray(theta, np.float32)
    return ((np.diff(theta, n=1, axis=1) * body_axis_weight) ** 2
            * smoothness_weight)


if __name__ == "__main__":
    key = jax.random.PRNGKey(0)
    params = dict(body_axis_weight=0.5, smoothness_weight=2.0)

    k1, k2, k3 = jax.random.split(key, 3)

    # Case 1: T divisible by 8, N-1 exactly one lane width (lane-dense output,
    #         2 row tiles -> exercises the pipelined / parallel grid).
    theta1 = jax.random.normal(k1, (16, 129), dtype=jnp.float32)
    out1 = jax.block_until_ready(smoothness_loss(theta1, **params))
    np.testing.assert_allclose(np.asarray(out1), _reference(theta1, **params),
                               rtol=1e-5, atol=1e-6)

    # Case 2: awkward small shape (T not a multiple of 8) -> single full-extent
    #         block, checks the fallback path.
    theta2 = jax.random.normal(k2, (12, 33), dtype=jnp.float32)
    out2 = jax.block_until_ready(smoothness_loss(theta2, **params))
    np.testing.assert_allclose(np.asarray(out2), _reference(theta2, **params),
                               rtol=1e-5, atol=1e-6)

    # Case 3: multi-tile grid with a non-128-multiple body axis (masked tail
    #         stores), still small.
    theta3 = jax.random.normal(k3, (64, 49), dtype=jnp.float32)
    out3 = jax.block_until_ready(smoothness_loss(theta3, **params))
    np.testing.assert_allclose(np.asarray(out3), _reference(theta3, **params),
                               rtol=1e-5, atol=1e-6)

    print("KERNEL_OK")
</pallas_src>

<mosaic_0001>
module attributes {stable_mosaic.version = 11 : i64} {
  func.func @_smoothness_kernel(%arg0: i32, %arg1: memref<16x129xf32, #tpu.memory_space<vmem>>, %arg2: memref<16x128xf32, #tpu.memory_space<vmem>>) attributes {dimension_semantics = [#tpu.dimension_semantics<parallel>], iteration_bounds = array<i64: 1>, scalar_prefetch = 0 : i64, scratch_operands = 0 : i64, tpu.core_type = #tpu.core_type<tc>, window_params = [{transform_indices = @transform_0, window_bounds = array<i64: 16, 129>}, {transform_indices = @transform_1, window_bounds = array<i64: 16, 128>}]} {
    %c0 = arith.constant 0 : index
    %c0_0 = arith.constant 0 : index
    %0 = vector.load %arg1[%c0, %c0_0] : memref<16x129xf32, #tpu.memory_space<vmem>>, vector<16x129xf32>
    %1 = vector.extract_strided_slice %0 {offsets = [0, 1], sizes = [16, 128], strides = [1, 1]} : vector<16x129xf32> to vector<16x128xf32>
    %2 = vector.extract_strided_slice %0 {offsets = [0, 0], sizes = [16, 128], strides = [1, 1]} : vector<16x129xf32> to vector<16x128xf32>
    %3 = arith.subf %1, %2 : vector<16x128xf32>
    %4 = arith.mulf %3, %3 : vector<16x128xf32>
    %cst = arith.constant 5.000000e-01 : f32
    %5 = vector.broadcast %cst : f32 to vector<16x128xf32>
    %6 = arith.mulf %4, %5 : vector<16x128xf32>
    %c0_1 = arith.constant 0 : index
    %c0_2 = arith.constant 0 : index
    %7 = vector.load %arg2[%c0_1, %c0_2] : memref<16x128xf32, #tpu.memory_space<vmem>>, vector<16x128xf32>
    tpu.vector_store %arg2[%c0_1, %c0_2], %6 {strides = array<i32>} : memref<16x128xf32, #tpu.memory_space<vmem>>, vector<16x128xf32>,
    return
  }
  func.func @transform_0(%arg0: i32) -> (i32, i32) {
    %c0_i32 = arith.constant 0 : i32
    %c0_i32_0 = arith.constant 0 : i32
    return %arg0, %c0_i32 : i32, i32
  }
  func.func @transform_1(%arg0: i32) -> (i32, i32) {
    %c0_i32 = arith.constant 0 : i32
    %c0_i32_0 = arith.constant 0 : i32
    return %arg0, %c0_i32 : i32, i32
  }
}

</mosaic_0001>

<llo_original>
// kernel: tpu_custom_call.1
$region0: #{tpu_custom_call.1}
  #allocation0 [shape = 'u32[]', space=smem, size = 0x4, offset = 0x4, fixed_abs, tag = 'smem constant byte address 0x4 - core index']
  #allocation1 [shape = 'u32[72,128]{1,0:T(1,128)}', space=vmem, size = 0x9000, scoped, tag = 'internal scratch']
  %s0 = inlined_call_operand.hbm [shape: f32[16,129], index: 0, kind: input, shape index: {}]
  %s1 = inlined_call_operand.hbm [shape: f32[16,128], index: 1, kind: output, shape index: {}]
  %s2 = sld [smem:[#allocation0]]
  $region18: #{tpu_custom_call.1} parent=0
    _
  %s4 = ssub.s32 1, %s2
  %s5 = scalar_select 0, %s4, %s2
  $region1: #{tpu_custom_call.1} parent=0
    #allocation2 [shape = 'u8[16384]{0}', space=vmem, size = 0x4000, scoped, tag = 'input window, operand 0, single buffered']
    #allocation3 [shape = 's32[1]{0}', space=sflag, size = 0x4, scoped, tag = 'scoped memory for tpu_custom_call.1']
    #allocation4 [shape = 's32[1]{0}', space=sflag, size = 0x4, scoped, tag = 'scoped memory for tpu_custom_call.1']
    #allocation5 [shape = 'u8[8192]{0}', space=vmem, size = 0x2000, scoped, tag = 'output window, operand 0, single buffered']
    %6 = vsyncpa [#allocation3], 0
    %7 = vsyncpa [#allocation4], 0
    // Predicated region
    $region2: #{tpu_custom_call.1} parent=1 // pred_check
      _
    $region3: #{tpu_custom_call.1} parent=1 // pred_check_branch
      %9 = sbr.rel (0) target = $region5
    $region4: #{tpu_custom_call.1} parent=1 // pred_region
      %11 = vsyncadd [#allocation3], 0
      %s12 = sshll.u32 %s0, 4
      %s13 = int_to_ptr.hbm [resolvable:$true] %s12
      %s14 = sshll.u32 [#allocation2], 4
      %s15 = int_to_ptr.vmem [resolvable:$true] %s14
      %20 = dma.hbm_to_vmem [thread:$0]  %s13, 512, %s15, [#allocation3], 256, 256, 16
    $region5: #{tpu_custom_call.1} parent=1 // pred_fallthru
      _
    // Predicated region
    $region6: #{tpu_custom_call.1} parent=1 // pred_check
      _
    $region7: #{tpu_custom_call.1} parent=1 // pred_check_branch
      %22 = sbr.rel (0) target = $region9
    $region8: #{tpu_custom_call.1} parent=1 // pred_region
      %24 = dma.done [#allocation3], 512
    $region9: #{tpu_custom_call.1} parent=1 // pred_fallthru
      _
    %v25 = vld [vmem:[#allocation2] sm:$0xff]
    %v26 = vld [vmem:[#allocation2 + $0x8] sm:$0xff]
    %v27 = vld [vmem:[#allocation2 + $0x10] sm:$0xff]
    %v28 = vld [vmem:[#allocation2 + $0x18] sm:$0xff]
    %31 = vrot.lane.b32.xlu0 %v25, 1
    %v32 = vpop.permute.xlu0 %31
    %33 = vrot.lane.b32.xlu0 %v27, 1
    %v34 = vpop.permute.xlu0 %33
    %v37 = vsub.f32 %v25, %v32
    %v38 = vsub.f32 %v26, %v32
    %v39 = vsub.f32 %v27, %v34
    %v40 = vsub.f32 %v28, %v34
    %v41 = vmul.f32 %v37, %v37
    %v42 = vmul.f32 %v38, %v38
    %v43 = vmul.f32 %v39, %v39
    %v44 = vmul.f32 %v40, %v40
    %v45 = vmul.f32 %v41, 0.5
    %v46 = vmul.f32 %v42, 0.5
    %v47 = vmul.f32 %v43, 0.5
    %v48 = vmul.f32 %v44, 0.5
    %53 = vrot.lane.b32.xlu0 %v45, 127
    %v54 = vpop.permute.xlu0 %53
    %55 = vrot.lane.b32.xlu0 %v46, 127
    %v56 = vpop.permute.xlu0 %55
    %57 = vrot.lane.b32.xlu0 %v47, 127
    %v58 = vpop.permute.xlu0 %57
    %59 = vrot.lane.b32.xlu0 %v48, 127
    %v60 = vpop.permute.xlu0 %59
    %vm61 = vcmask 1039360
    %v62 = vsel %vm61, %v54, %v56
    %v63 = vsel %vm61, %v58, %v60
    %66 = vst [vmem:[#allocation5] sm:$0xff] %v62
    %67 = vst [vmem:[#allocation5 + $0x8] sm:$0xff] %v63
    // Predicated region
    $region10: #{tpu_custom_call.1} parent=1 // pred_check
      _
    $region11: #{tpu_custom_call.1} parent=1 // pred_check_branch
      %69 = sbr.rel (0) target = $region13
    $region12: #{tpu_custom_call.1} parent=1 // pred_region
      %71 = vsyncadd [#allocation4], 0
      %s72 = sshll.u32 [#allocation5], 4
      %s73 = int_to_ptr.vmem [resolvable:$true] %s72
      %s74 = sshll.u32 %s1, 4
      %s75 = int_to_ptr.hbm [resolvable:$true] %s74
      %80 = dma.vmem_to_hbm [thread:$0]  %s73, 256, %s75, [#allocation4], 128, 128, 8
    $region13: #{tpu_custom_call.1} parent=1 // pred_fallthru
      _
    // Predicated region
    $region14: #{tpu_custom_call.1} parent=1 // pred_check
      _
    $region15: #{tpu_custom_call.1} parent=1 // pred_check_branch
      %82 = sbr.rel (0) target = $region17
    $region16: #{tpu_custom_call.1} parent=1 // pred_region
      %84 = dma.done [#allocation4], 256
    $region17: #{tpu_custom_call.1} parent=1 // pred_fallthru
      _
    %85 = vsyncpa [#allocation3], 1
    %86 = vsyncpa [#allocation4], 1

</llo_original>
